<compile_context>
chip_gen: v5e
topology: v5e:2x2
jax: 0.10.0
libtpu: 0.0.40
codegen_flags: <defaults>
</compile_context>

<pallas_src>
import jax
import jax.numpy as jnp
from jax import lax
from jax.experimental import pallas as pl
from jax.experimental.pallas import tpu as pltpu


def _fused_kernel(x_ref, m_ref, c_ref, o_ref):
    # x_ref: (1, CT, HW)  m_ref: (HW, 9)  c_ref: (CT, 10) f32  o_ref: (1, CT, 1)
    # One MXU matmul yields all 9 per-channel partial sums (f32 accumulate).
    s = jnp.dot(x_ref[0], m_ref[...],
                preferred_element_type=jnp.float32,
                precision=lax.Precision.HIGHEST)              # (CT, 9)
    coef = c_ref[...]                                         # (CT, 10)
    mean = jnp.sum(s * coef[:, :9], axis=1, keepdims=True) + coef[:, 9:10]
    o_ref[...] = jax.nn.sigmoid(mean).reshape(o_ref.shape).astype(o_ref.dtype)


def _make_selector(H, W, dtype):
    """Static (HW, 9) 0/1 selector: [ones, row0, rowH-1, col0, colW-1,
    corner(0,0), corner(0,W-1), corner(H-1,0), corner(H-1,W-1)]."""
    HW = H * W
    idx = jnp.arange(HW, dtype=jnp.int32)
    row, col = idx // W, idx % W
    cols = [
        jnp.ones((HW,), jnp.float32),
        (row == 0), (row == H - 1),
        (col == 0), (col == W - 1),
        (idx == 0), (idx == W - 1),
        (idx == (H - 1) * W), (idx == HW - 1),
    ]
    return jnp.stack([c.astype(jnp.float32) for c in cols], axis=1).astype(dtype)


def _make_coefficients(weight, bias, H, W):
    """(C, 10) f32: inclusion-exclusion coefficients (pre-scaled by 1/HW)
    matching the selector columns, plus bias in column 9."""
    C = bias.shape[0]
    w = weight.reshape(C, 9).astype(jnp.float32)     # taps in ky*3+kx order
    inv = 1.0 / float(H * W)
    w00, w01, w02, w10, w11, w12, w20, w21, w22 = (w[:, k] for k in range(9))
    coef = jnp.stack([
        w00 + w01 + w02 + w10 + w11 + w12 + w20 + w21 + w22,   # * total
        -(w20 + w21 + w22),                                     # * row 0 sum
        -(w00 + w01 + w02),                                     # * row H-1 sum
        -(w02 + w12 + w22),                                     # * col 0 sum
        -(w00 + w10 + w20),                                     # * col W-1 sum
        w22,                                                    # * x[0, 0]
        w20,                                                    # * x[0, W-1]
        w02,                                                    # * x[H-1, 0]
        w00,                                                    # * x[H-1, W-1]
    ], axis=1) * inv
    return jnp.concatenate([coef, bias.reshape(C, 1).astype(jnp.float32)], axis=1)


def _pick_channel_tiling(N, C, HW, itemsize, target_bytes):
    """Pick (CT, C_pad) with C_pad % CT == 0 and CT either the full channel
    extent or a multiple of 8 (sublane constraint).  Preference:
      1. whole-C block if it fits (split in two when N == 1 so the grid has
         >= 2 steps for v7x's two TensorCores),
      2. largest multiple-of-8 divisor of C that fits (no padding),
      3. zero-pad channels and use a large multiple-of-8 tile (blocks never
         balloon past the VMEM budget for awkward C)."""
    block_bytes = C * HW * itemsize
    if block_bytes <= target_bytes:
        if N == 1 and C % 16 == 0 and block_bytes > (1 << 20):
            return C // 2, C
        return C, C
    max_ct = max(8, (target_bytes // (HW * itemsize)) // 8 * 8)
    best = 0
    for ct in range(8, min(C, max_ct) + 1, 8):
        if C % ct == 0:
            best = ct
    if best >= max(128, max_ct // 2):
        return best, C
    ct = int(max_ct)
    c_pad = -(-C // ct) * ct
    return ct, c_pad


def channel_aifengheguai(x, weight, bias, *, target_block_bytes=6 << 20):
    """x: (N, C, H, W); weight: (C, 1, 3, 3); bias: (C,). Returns (N, C, 1, 1)."""
    N, C, H, W = x.shape
    HW = H * W
    itemsize = jnp.dtype(x.dtype).itemsize
    CT, C_pad = _pick_channel_tiling(N, C, HW, itemsize, target_block_bytes)
    n_ct = C_pad // CT

    x_r = x.reshape(N, C, HW)                         # free, contiguous
    coef = _make_coefficients(weight, bias, H, W)     # (C, 10) f32
    if C_pad != C:
        x_r = jnp.pad(x_r, ((0, 0), (0, C_pad - C), (0, 0)))
        coef = jnp.pad(coef, ((0, C_pad - C), (0, 0)))
    sel = _make_selector(H, W, x.dtype)               # (HW, 9), fetched once

    m_item = jnp.dtype(sel.dtype).itemsize
    vmem_need = (2 * CT * HW * itemsize               # double-buffered x blocks
                 + HW * 128 * m_item                  # selector (lane-padded)
                 + CT * 128 * 4                       # coefficients (lane-padded)
                 + (2 << 20))                         # outputs + headroom
    vmem_limit = int(max(vmem_need, 16 << 20))

    cost = pl.CostEstimate(
        flops=2 * 9 * N * C_pad * HW + 20 * N * C_pad,
        transcendentals=N * C_pad,
        bytes_accessed=(N * C_pad * HW + N * C_pad) * itemsize
                       + HW * 9 * m_item + C_pad * 10 * 4,
    )

    out = pl.pallas_call(
        _fused_kernel,
        out_shape=jax.ShapeDtypeStruct((N, C_pad, 1), x.dtype),
        grid_spec=pltpu.PrefetchScalarGridSpec(
            num_scalar_prefetch=0,
            grid=(N, n_ct),
            in_specs=[
                pl.BlockSpec((1, CT, HW), lambda n, c: (n, c, 0)),
                pl.BlockSpec((HW, 9), lambda n, c: (0, 0)),
                pl.BlockSpec((CT, 10), lambda n, c: (c, 0)),
            ],
            out_specs=pl.BlockSpec((1, CT, 1), lambda n, c: (n, c, 0)),
        ),
        compiler_params=pltpu.CompilerParams(
            dimension_semantics=("parallel", "parallel"),
            vmem_limit_bytes=vmem_limit),
        cost_estimate=cost,
    )(x_r, sel, coef)

    return out[:, :C, :].reshape(N, C, 1, 1)


def _reference(x, weight, bias):
    y = lax.conv_general_dilated(
        x, weight, window_strides=(1, 1), padding=((1, 1), (1, 1)),
        dimension_numbers=("NCHW", "OIHW", "NCHW"),
        feature_group_count=x.shape[1])
    y = y + bias.reshape(1, -1, 1, 1)
    pooled = jnp.mean(y, axis=(2, 3), keepdims=True)
    return jax.nn.sigmoid(pooled)


if __name__ == "__main__":
    key = jax.random.PRNGKey(0)
    k1, k2, k3 = jax.random.split(key, 3)
    N, C, H, W = 2, 4, 16, 16
    x = jax.random.normal(k1, (N, C, H, W), dtype=jnp.float32)
    # Same parameter shapes as nn.Conv2d(dim, dim, 3, 1, 1, groups=dim).
    weight = jax.random.normal(k2, (C, 1, 3, 3), dtype=jnp.float32) * 0.1
    bias = jax.random.normal(k3, (C,), dtype=jnp.float32) * 0.1

    out = channel_aifengheguai(x, weight, bias)
    out = jax.block_until_ready(out)

    ref = _reference(x, weight, bias)
    assert out.shape == (N, C, 1, 1), out.shape
    assert jnp.allclose(out, ref, atol=1e-5, rtol=1e-5), float(jnp.max(jnp.abs(out - ref)))
    print("KERNEL_OK")
</pallas_src>

<mosaic_0001>
module attributes {stable_mosaic.version = 11 : i64} {
  func.func @_fused_kernel(%arg0: i32, %arg1: i32, %arg2: memref<1x4x256xf32, #tpu.memory_space<vmem>>, %arg3: memref<256x9xf32, #tpu.memory_space<vmem>>, %arg4: memref<4x10xf32, #tpu.memory_space<vmem>>, %arg5: memref<1x4x1xf32, #tpu.memory_space<vmem>>) attributes {dimension_semantics = [#tpu.dimension_semantics<parallel>, #tpu.dimension_semantics<parallel>], iteration_bounds = array<i64: 2, 1>, scalar_prefetch = 0 : i64, scratch_operands = 0 : i64, tpu.core_type = #tpu.core_type<tc>, window_params = [{transform_indices = @transform_0, window_bounds = array<i64: 1, 4, 256>}, {pipeline_mode = #tpu.pipeline_mode<synchronous>, transform_indices = @transform_1, window_bounds = array<i64: 256, 9>}, {transform_indices = @transform_2, window_bounds = array<i64: 4, 10>}, {transform_indices = @transform_3, window_bounds = array<i64: 1, 4, 1>}]} {
    %c0 = arith.constant 0 : index
    %c0_0 = arith.constant 0 : index
    %c0_1 = arith.constant 0 : index
    %0 = vector.load %arg2[%c0, %c0_0, %c0_1] : memref<1x4x256xf32, #tpu.memory_space<vmem>>, vector<1x4x256xf32>
    %1 = vector.shape_cast %0 : vector<1x4x256xf32> to vector<4x256xf32>
    %c0_2 = arith.constant 0 : index
    %c0_3 = arith.constant 0 : index
    %2 = vector.load %arg3[%c0_2, %c0_3] : memref<256x9xf32, #tpu.memory_space<vmem>>, vector<256x9xf32>
    %cst = arith.constant dense<0.000000e+00> : vector<4x9xf32>
    %3 = tpu.matmul %1, %2, %cst {dimension_numbers = #tpu.dot_dimension_numbers<[1], [0], [0], [1], [0, 0, 1, 1], [], []>, precision = #tpu.contract_precision<fp32>} : vector<4x256xf32>, vector<256x9xf32>, vector<4x9xf32> -> vector<4x9xf32>
    %c0_4 = arith.constant 0 : index
    %c0_5 = arith.constant 0 : index
    %4 = vector.load %arg4[%c0_4, %c0_5] : memref<4x10xf32, #tpu.memory_space<vmem>>, vector<4x10xf32>
    %5 = vector.extract_strided_slice %4 {offsets = [0, 0], sizes = [4, 9], strides = [1, 1]} : vector<4x10xf32> to vector<4x9xf32>
    %6 = arith.mulf %3, %5 : vector<4x9xf32>
    %cst_6 = arith.constant dense<0.000000e+00> : vector<4xf32>
    %7 = vector.multi_reduction <add>, %6, %cst_6 [1] : vector<4x9xf32> to vector<4xf32>
    %8 = vector.shape_cast %7 : vector<4xf32> to vector<4x1xf32>
    %9 = vector.extract_strided_slice %4 {offsets = [0, 9], sizes = [4, 1], strides = [1, 1]} : vector<4x10xf32> to vector<4x1xf32>
    %10 = arith.addf %8, %9 : vector<4x1xf32>
    %11 = arith.negf %10 : vector<4x1xf32>
    %12 = math.exp %11 : vector<4x1xf32>
    %cst_7 = arith.constant 1.000000e+00 : f32
    %13 = vector.broadcast %cst_7 : f32 to vector<4x1xf32>
    %14 = arith.addf %13, %12 : vector<4x1xf32>
    %15 = arith.divf %13, %14 : vector<4x1xf32>
    %16 = vector.shape_cast %15 : vector<4x1xf32> to vector<1x4x1xf32>
    %c0_8 = arith.constant 0 : index
    %c0_9 = arith.constant 0 : index
    %c0_10 = arith.constant 0 : index
    %17 = vector.load %arg5[%c0_8, %c0_9, %c0_10] : memref<1x4x1xf32, #tpu.memory_space<vmem>>, vector<1x4x1xf32>
    tpu.vector_store %arg5[%c0_8, %c0_9, %c0_10], %16 {strides = array<i32>} : memref<1x4x1xf32, #tpu.memory_space<vmem>>, vector<1x4x1xf32>,
    return
  }
  func.func @transform_0(%arg0: i32, %arg1: i32) -> (i32, i32, i32) {
    %c0_i32 = arith.constant 0 : i32
    %c0_i32_0 = arith.constant 0 : i32
    return %arg0, %arg1, %c0_i32 : i32, i32, i32
  }
  func.func @transform_1(%arg0: i32, %arg1: i32) -> (i32, i32) {
    %c0_i32 = arith.constant 0 : i32
    %c0_i32_0 = arith.constant 0 : i32
    %c0_i32_1 = arith.constant 0 : i32
    return %c0_i32, %c0_i32_0 : i32, i32
  }
  func.func @transform_2(%arg0: i32, %arg1: i32) -> (i32, i32) {
    %c0_i32 = arith.constant 0 : i32
    %c0_i32_0 = arith.constant 0 : i32
    return %arg1, %c0_i32 : i32, i32
  }
  func.func @transform_3(%arg0: i32, %arg1: i32) -> (i32, i32, i32) {
    %c0_i32 = arith.constant 0 : i32
    %c0_i32_0 = arith.constant 0 : i32
    return %arg0, %arg1, %c0_i32 : i32, i32, i32
  }
}

</mosaic_0001>

<llo_original>
// kernel: tpu_custom_call.1
$region0: #{tpu_custom_call.1}
  #allocation0 [shape = 'u32[]', space=smem, size = 0x4, offset = 0x4, fixed_abs, tag = 'smem constant byte address 0x4 - core index']
  #allocation1 [shape = 'u32[72,128]{1,0:T(1,128)}', space=vmem, size = 0x9000, scoped, tag = 'internal scratch']
  %s0 = inlined_call_operand.vmem [shape: f32[2,4,256], index: 0, kind: input, shape index: {}]
  %s1 = inlined_call_operand.vmem [shape: f32[256,9], index: 1, kind: input, shape index: {}]
  %s2 = inlined_call_operand.vmem [shape: f32[4,10], index: 2, kind: input, shape index: {}]
  %s3 = inlined_call_operand.vmem [shape: f32[2,4,1], index: 3, kind: output, shape index: {}]
  %s4 = sld [smem:[#allocation0]]
  $region45: #{tpu_custom_call.1} parent=0
    _
  %s6 = ssub.s32 1, %s4
  %s7 = scalar_select 0, %s6, %s4
  loop: start=0, step=1, limit=4
  $region2: #{tpu_custom_call.1} parent=0 // loop_pre_header
    _
  $region3: #{tpu_custom_call.1} parent=0 // loop_header
    %s9 = sphi 0, %s13
    %p10 = scmp.ge.s32.totalorder %s9, 4
    %s16 = sphi 0, %s28
    %s17 = sphi 0, %s24
    %s18 = sphi 0, %s16
    %s19 = sphi 0, %s17
    %s20 = sphi 0, %s18
    %s21 = sphi 0, %s19
    %s33 = sphi 0, %s35
    %s36 = sphi 0, %s33
    %s37 = sphi 0, %s36
    %s53 = sphi 0, %s37
    %s57 = sphi 0, %s57
    %s59 = sphi 0, %s57
    %s60 = sphi 0, %s59
    %s74 = sphi 0, %s60
    %s80 = sphi 0, %s82
    %s83 = sphi 0, %s80
    %s84 = sphi 0, %s83
    %s100 = sphi 0, %s84
    %s108 = sphi 0, %s110
    %s111 = sphi 0, %s108
    %s112 = sphi 0, %s111
    %s128 = sphi 0, %s112
  $region4: #{tpu_custom_call.1} parent=0 // loop_header_branch
    %12 = sbr.rel (%p10) target = $region8
  $region5: #{tpu_custom_call.1} parent=0 // loop_body
    %s14 = ssub.s32 %s9, 1
    %s15 = ssub.s32 %s9, 2
    %s22 = sadd.s32 1, %s17
    %p23 = scmp.ge.s32.totalorder %s22, 1
    %s24 = scalar_select %p23, 0, %s22
    %s25 = sadd.s32 1, %s16
    %s26 = scalar_select %p23, %s25, %s16
    %p27 = scmp.ge.s32.totalorder %s26, 2
    %s28 = scalar_select %p27, 0, %s26
    %s29 = ssub.s32 %s16, %s28
    %s30 = ssub.s32 %s17, %s24
    %s31 = sor.u32 %s29, %s30
    %p32 = scmp.eq.s32.totalorder %s31, 0
    %s34 = sadd.s32 %s33, 1
    %s35 = scalar_select %p32, %s33, %s34
    %p38 = pneg %p32
    %p39 = scmp.eq.s32.totalorder %s9, 1
    %p40 = por %p38, %p39
    %p41 = scmp.ne.s32.totalorder %s33, %s36
    %p42 = scmp.eq.s32.totalorder %s9, 0
    %p43 = por %p41, %p42
    %p44 = scmp.ne.s32.totalorder %s33, %s36
    %p45 = scmp.eq.s32.totalorder %s14, 1
    %p46 = por %p44, %p45
    %p47 = scmp.ne.s32.totalorder %s36, %s37
    %p48 = scmp.eq.s32.totalorder %s14, 0
    %p49 = por %p47, %p48
    %p50 = scmp.ne.s32.totalorder %s36, %s37
    %p51 = scmp.eq.s32.totalorder %s15, 1
    %p52 = por %p50, %p51
    %p54 = scmp.ne.s32.totalorder %s37, %s53
    %p55 = scmp.eq.s32.totalorder %s15, 0
    %p56 = por %p54, %p55
    %s58 = sadd.s32 %s57, 1
    %p61 = scmp.eq.s32.totalorder %s9, 1
    %p62 = scmp.ne.s32.totalorder %s57, %s59
    %p63 = scmp.eq.s32.totalorder %s9, 0
    %p64 = por %p62, %p63
    %p65 = scmp.ne.s32.totalorder %s57, %s59
    %p66 = scmp.eq.s32.totalorder %s14, 1
    %p67 = por %p65, %p66
    %p68 = scmp.ne.s32.totalorder %s59, %s60
    %p69 = scmp.eq.s32.totalorder %s14, 0
    %p70 = por %p68, %p69
    %p71 = scmp.ne.s32.totalorder %s59, %s60
    %p72 = scmp.eq.s32.totalorder %s15, 1
    %p73 = por %p71, %p72
    %p75 = scmp.ne.s32.totalorder %s60, %s74
    %p76 = scmp.eq.s32.totalorder %s15, 0
    %p77 = por %p75, %p76
    %s78 = ssub.s32 %s17, %s24
    %p79 = scmp.eq.s32.totalorder %s78, 0
    %s81 = sadd.s32 %s80, 1
    %s82 = scalar_select %p79, %s80, %s81
    %p85 = pneg %p79
    %p86 = scmp.eq.s32.totalorder %s9, 1
    %p87 = por %p85, %p86
    %p88 = scmp.ne.s32.totalorder %s80, %s83
    %p89 = scmp.eq.s32.totalorder %s9, 0
    %p90 = por %p88, %p89
    %p91 = scmp.ne.s32.totalorder %s80, %s83
    %p92 = scmp.eq.s32.totalorder %s14, 1
    %p93 = por %p91, %p92
    %p94 = scmp.ne.s32.totalorder %s83, %s84
    %p95 = scmp.eq.s32.totalorder %s14, 0
    %p96 = por %p94, %p95
    %p97 = scmp.ne.s32.totalorder %s83, %s84
    %p98 = scmp.eq.s32.totalorder %s15, 1
    %p99 = por %p97, %p98
    %p101 = scmp.ne.s32.totalorder %s84, %s100
    %p102 = scmp.eq.s32.totalorder %s15, 0
    %p103 = por %p101, %p102
    %s104 = ssub.s32 %s16, %s28
    %s105 = ssub.s32 %s17, %s24
    %s106 = sor.u32 %s104, %s105
    %p107 = scmp.eq.s32.totalorder %s106, 0
    %s109 = sadd.s32 %s108, 1
    %s110 = scalar_select %p107, %s108, %s109
    %p113 = pneg %p107
    %p114 = scmp.eq.s32.totalorder %s9, 1
    %p115 = por %p113, %p114
    %p116 = scmp.ne.s32.totalorder %s108, %s111
    %p117 = scmp.eq.s32.totalorder %s9, 0
    %p118 = por %p116, %p117
    %p119 = scmp.ne.s32.totalorder %s108, %s111
    %p120 = scmp.eq.s32.totalorder %s14, 1
    %p121 = por %p119, %p120
    %p122 = scmp.ne.s32.totalorder %s111, %s112
    %p123 = scmp.eq.s32.totalorder %s14, 0
    %p124 = por %p122, %p123
    %p125 = scmp.ne.s32.totalorder %s111, %s112
    %p126 = scmp.eq.s32.totalorder %s15, 1
    %p127 = por %p125, %p126
    %p129 = scmp.ne.s32.totalorder %s112, %s128
    %p130 = scmp.eq.s32.totalorder %s15, 0
    %p131 = por %p129, %p130
    %p132 = scmp.le.s32.totalorder 1, %s9
    %p133 = scmp.lt.s32.totalorder %s9, 3
    %p134 = pnand %p132, %p133
    %p135 = pneg %p134
    // Predicated region
    $region9: #{tpu_custom_call.1} parent=5 // pred_check
      _
    $region10: #{tpu_custom_call.1} parent=5 // pred_check_branch
      %137 = sbr.rel (%p134) target = $region12
    $region11: #{tpu_custom_call.1} parent=5 // pred_region
      %s138 = ssub.s32 %s9, 1
      // Predicated region
      $region13: #{tpu_custom_call.1} parent=11 // pred_check
        %p139 = pneg %p70
      $region14: #{tpu_custom_call.1} parent=11 // pred_check_branch
        %141 = sbr.rel (%p139) target = $region16
      $region15: #{tpu_custom_call.1} parent=11 // pred_region
        _
      $region16: #{tpu_custom_call.1} parent=11 // pred_fallthru
        _
      // Predicated region
      $region17: #{tpu_custom_call.1} parent=11 // pred_check
        %p142 = pneg %p96
      $region18: #{tpu_custom_call.1} parent=11 // pred_check_branch
        %144 = sbr.rel (%p142) target = $region20
      $region19: #{tpu_custom_call.1} parent=11 // pred_region
        %p145 = scmp.lt.s32.totalorder %s19, 0
        %s146 = scalar_select %p145, %s19, 0
        %s147 = smul.addr %s146, 4
        %s148 = scalar_lea.vmem %s2, %s147
      $region20: #{tpu_custom_call.1} parent=11 // pred_fallthru
        _
    $region12: #{tpu_custom_call.1} parent=5 // pred_fallthru
      _
    %p149 = scmp.lt.s32.totalorder %s9, 2
    // Predicated region
    $region21: #{tpu_custom_call.1} parent=5 // pred_check
      %p150 = pneg %p149
    $region22: #{tpu_custom_call.1} parent=5 // pred_check_branch
      %152 = sbr.rel (%p150) target = $region24
    $region23: #{tpu_custom_call.1} parent=5 // pred_region
      // Predicated region
      $region25: #{tpu_custom_call.1} parent=23 // pred_check
        %p153 = pneg %p43
      $region26: #{tpu_custom_call.1} parent=23 // pred_check_branch
        %155 = sbr.rel (%p153) target = $region28
      $region27: #{tpu_custom_call.1} parent=23 // pred_region
        %p156 = scmp.lt.s32.totalorder %s16, 1
        %s157 = scalar_select %p156, %s16, 1
        %p158 = scmp.lt.s32.totalorder %s17, 0
        %s159 = scalar_select %p158, %s17, 0
        %s160 = smul.addr %s159, 2
        %s161 = smul.addr %s157, 2
        %s162 = sadd.s32 %s160, %s161
        %s163 = smul.addr %s162, 4
        %s164 = scalar_lea.vmem %s0, %s163
      $region28: #{tpu_custom_call.1} parent=23 // pred_fallthru
        _
    $region24: #{tpu_custom_call.1} parent=5 // pred_fallthru
      _
    %p165 = scmp.le.s32.totalorder 1, %s9
    %p166 = scmp.lt.s32.totalorder %s9, 3
    %p167 = pnand %p165, %p166
    %p168 = pneg %p167
    // Predicated region
    $region29: #{tpu_custom_call.1} parent=5 // pred_check
      _
    $region30: #{tpu_custom_call.1} parent=5 // pred_check_branch
      %170 = sbr.rel (%p167) target = $region32
    $region31: #{tpu_custom_call.1} parent=5 // pred_region
      %s171 = ssub.s32 %s9, 1
      %p172 = scmp.lt.s32.totalorder %s18, 1
      %s173 = scalar_select %p172, %s18, 1
      %p174 = scmp.lt.s32.totalorder %s19, 0
      %s175 = scalar_select %p174, %s19, 0
      %s176 = smul.addr %s175, 2
      %s177 = smul.addr %s173, 2
      %s178 = sadd.s32 %s176, %s177
      %s179 = smul.addr %s178, 4
      %s180 = scalar_lea.vmem %s0, %s179
      %p181 = pneg %p49
      %p182 = pneg %p46
      %p183 = pneg %p70
      %p184 = pneg %p67
      %p185 = scmp.lt.s32.totalorder %s19, 0
      %s186 = scalar_select %p185, %s19, 0
      %s187 = smul.addr %s186, 4
      %s188 = scalar_lea.vmem %s2, %s187
      %p189 = pneg %p96
      %p190 = pneg %p93
      %p191 = pneg %p124
      %p192 = pneg %p121
      %p193 = scmp.lt.s32.totalorder %s18, 1
      %s194 = scalar_select %p193, %s18, 1
      %p195 = scmp.lt.s32.totalorder %s19, 0
      %s196 = scalar_select %p195, %s19, 0
      %s197 = sadd.s32 %s196, %s194
      %s198 = smul.addr %s197, 4
      %s199 = scalar_lea.vmem %s3, %s198
      %p200 = scmp.lt.s32.totalorder %s18, 1
      %s201 = scalar_select %p200, %s18, 1
      %p202 = scmp.lt.s32.totalorder %s19, 0
      %s203 = scalar_select %p202, %s19, 0
      %s204 = smul.addr %s203, 2
      %s205 = smul.addr %s201, 2
      %s206 = sadd.s32 %s204, %s205
      %s207 = smul.addr %s206, 4
      %s208 = scalar_lea.vmem %s0, %s207
      %p209 = scmp.lt.s32.totalorder %s19, 0
      %s210 = scalar_select %p209, %s19, 0
      %s211 = smul.addr %s210, 4
      %s212 = scalar_lea.vmem %s2, %s211
      %p213 = scmp.lt.s32.totalorder %s18, 1
      %s214 = scalar_select %p213, %s18, 1
      %p215 = scmp.lt.s32.totalorder %s19, 0
      %s216 = scalar_select %p215, %s19, 0
      %s217 = sadd.s32 %s216, %s214
      %s218 = smul.addr %s217, 4
      %s219 = scalar_lea.vmem %s3, %s218
      %v220 = vld [vmem:[%s208] sm:$0xff]
      %v221 = vld [vmem:[%s1] sm:$0xff]
      %v222 = vld [vmem:[%s1 + $0x8] sm:$0xff]
      %v223 = vld [vmem:[%s1 + $0x10] sm:$0xff]
      %v224 = vld [vmem:[%s1 + $0x18] sm:$0xff]
      %v225 = vld [vmem:[%s1 + $0x20] sm:$0xff]
      %v226 = vld [vmem:[%s1 + $0x28] sm:$0xff]
      %v227 = vld [vmem:[%s1 + $0x30] sm:$0xff]
      %v228 = vld [vmem:[%s1 + $0x38] sm:$0xff]
      %v229 = vld [vmem:[%s1 + $0x40] sm:$0xff]
      %v230 = vld [vmem:[%s1 + $0x48] sm:$0xff]
      %v231 = vld [vmem:[%s1 + $0x50] sm:$0xff]
      %v232 = vld [vmem:[%s1 + $0x58] sm:$0xff]
      %v233 = vld [vmem:[%s1 + $0x60] sm:$0xff]
      %v234 = vld [vmem:[%s1 + $0x68] sm:$0xff]
      %v235 = vld [vmem:[%s1 + $0x70] sm:$0xff]
      %v236 = vld [vmem:[%s1 + $0x78] sm:$0xff]
      %v237 = vld [vmem:[%s1 + $0x80] sm:$0xff]
      %v238 = vld [vmem:[%s1 + $0x88] sm:$0xff]
      %v239 = vld [vmem:[%s1 + $0x90] sm:$0xff]
      %v240 = vld [vmem:[%s1 + $0x98] sm:$0xff]
      %v241 = vld [vmem:[%s1 + $0xa0] sm:$0xff]
      %v242 = vld [vmem:[%s1 + $0xa8] sm:$0xff]
      %v243 = vld [vmem:[%s1 + $0xb0] sm:$0xff]
      %v244 = vld [vmem:[%s1 + $0xb8] sm:$0xff]
      %v245 = vld [vmem:[%s1 + $0xc0] sm:$0xff]
      %v246 = vld [vmem:[%s1 + $0xc8] sm:$0xff]
      %v247 = vld [vmem:[%s1 + $0xd0] sm:$0xff]
      %v248 = vld [vmem:[%s1 + $0xd8] sm:$0xff]
      %v249 = vld [vmem:[%s1 + $0xe0] sm:$0xff]
      %v250 = vld [vmem:[%s1 + $0xe8] sm:$0xff]
      %v251 = vld [vmem:[%s1 + $0xf0] sm:$0xff]
      %v252 = vld [vmem:[%s1 + $0xf8] sm:$0xff]
      %254 = vst [vmem:[#allocation1] ss:$2 sm:$0xff] %v220
      %v255 = vld.sshfl [vmem:[#allocation1] sm:$0xff pattern:$0x75316420]
      %v256 = vld.sshfl [vmem:[#allocation1 + $0x8] sm:$0xff pattern:$0x75316420]
      %v259 = vand.u32 %v236, 4294901760
      %260 = vmatpush.msra.mxu0 %v259
      %v261 = vand.u32 %v235, 4294901760
      %262 = vmatpush.msra.mxu0 %v261
      %v263 = vand.u32 %v234, 4294901760
      %264 = vmatpush.msra.mxu0 %v263
      %v265 = vand.u32 %v233, 4294901760
      %266 = vmatpush.msra.mxu0 %v265
      %v267 = vand.u32 %v232, 4294901760
      %268 = vmatpush.msra.mxu0 %v267
      %v269 = vand.u32 %v231, 4294901760
      %270 = vmatpush.msra.mxu0 %v269
      %v271 = vand.u32 %v230, 4294901760
      %272 = vmatpush.msra.mxu0 %v271
      %v273 = vand.u32 %v229, 4294901760
      %274 = vmatpush.msra.mxu0 %v273
      %v275 = vand.u32 %v228, 4294901760
      %276 = vmatpush.msra.mxu0 %v275
      %v277 = vand.u32 %v227, 4294901760
      %278 = vmatpush.msra.mxu0 %v277
      %v279 = vand.u32 %v226, 4294901760
      %280 = vmatpush.msra.mxu0 %v279
      %v281 = vand.u32 %v225, 4294901760
      %282 = vmatpush.msra.mxu0 %v281
      %v283 = vand.u32 %v224, 4294901760
      %284 = vmatpush.msra.mxu0 %v283
      %v285 = vand.u32 %v223, 4294901760
      %286 = vmatpush.msra.mxu0 %v285
      %v287 = vand.u32 %v222, 4294901760
      %288 = vmatpush.msra.mxu0 %v287
      %v289 = vand.u32 %v221, 4294901760
      %290 = vmatpush.msra.mxu0 %v289
      %v291 = vand.u32 %v255, 4294901760
      %v292 = vsub.f32 %v255, %v291
      %v293 = vand.u32 %v292, 4294901760
      %v294 = vsub.f32 %v292, %v293
      %v295 = vand.u32 %v294, 4294901760
      %296 = vmatmul.f32.gmra.mxu0 %v295
      %v297 = vpop.f32.mrf.mxu0
      %v298 = vadd.f32 0.0, %v297
      %299 = vdwg.mxu0
      %v300 = vand.u32 %v236, 4294901760
      %v301 = vsub.f32 %v236, %v300
      %v302 = vand.u32 %v301, 4294901760
      %v303 = vsub.f32 %v301, %v302
      %v304 = vand.u32 %v303, 4294901760
      %305 = vmatpush.msra.mxu0 %v304
      %v306 = vand.u32 %v235, 4294901760
      %v307 = vsub.f32 %v235, %v306
      %v308 = vand.u32 %v307, 4294901760
      %v309 = vsub.f32 %v307, %v308
      %v310 = vand.u32 %v309, 4294901760
      %311 = vmatpush.msra.mxu0 %v310
      %v312 = vand.u32 %v234, 4294901760
      %v313 = vsub.f32 %v234, %v312
      %v314 = vand.u32 %v313, 4294901760
      %v315 = vsub.f32 %v313, %v314
      %v316 = vand.u32 %v315, 4294901760
      %317 = vmatpush.msra.mxu0 %v316
      %v318 = vand.u32 %v233, 4294901760
      %v319 = vsub.f32 %v233, %v318
      %v320 = vand.u32 %v319, 4294901760
      %v321 = vsub.f32 %v319, %v320
      %v322 = vand.u32 %v321, 4294901760
      %323 = vmatpush.msra.mxu0 %v322
      %v324 = vand.u32 %v232, 4294901760
      %v325 = vsub.f32 %v232, %v324
      %v326 = vand.u32 %v325, 4294901760
      %v327 = vsub.f32 %v325, %v326
      %v328 = vand.u32 %v327, 4294901760
      %329 = vmatpush.msra.mxu0 %v328
      %v330 = vand.u32 %v231, 4294901760
      %v331 = vsub.f32 %v231, %v330
      %v332 = vand.u32 %v331, 4294901760
      %v333 = vsub.f32 %v331, %v332
      %v334 = vand.u32 %v333, 4294901760
      %335 = vmatpush.msra.mxu0 %v334
      %v336 = vand.u32 %v230, 4294901760
      %v337 = vsub.f32 %v230, %v336
      %v338 = vand.u32 %v337, 4294901760
      %v339 = vsub.f32 %v337, %v338
      %v340 = vand.u32 %v339, 4294901760
      %341 = vmatpush.msra.mxu0 %v340
      %v342 = vand.u32 %v229, 4294901760
      %v343 = vsub.f32 %v229, %v342
      %v344 = vand.u32 %v343, 4294901760
      %v345 = vsub.f32 %v343, %v344
      %v346 = vand.u32 %v345, 4294901760
      %347 = vmatpush.msra.mxu0 %v346
      %v348 = vand.u32 %v228, 4294901760
      %v349 = vsub.f32 %v228, %v348
      %v350 = vand.u32 %v349, 4294901760
      %v351 = vsub.f32 %v349, %v350
      %v352 = vand.u32 %v351, 4294901760
      %353 = vmatpush.msra.mxu0 %v352
      %v354 = vand.u32 %v227, 4294901760
      %v355 = vsub.f32 %v227, %v354
      %v356 = vand.u32 %v355, 4294901760
      %v357 = vsub.f32 %v355, %v356
      %v358 = vand.u32 %v357, 4294901760
      %359 = vmatpush.msra.mxu0 %v358
      %v360 = vand.u32 %v226, 4294901760
      %v361 = vsub.f32 %v226, %v360
      %v362 = vand.u32 %v361, 4294901760
      %v363 = vsub.f32 %v361, %v362
      %v364 = vand.u32 %v363, 4294901760
      %365 = vmatpush.msra.mxu0 %v364
      %v366 = vand.u32 %v225, 4294901760
      %v367 = vsub.f32 %v225, %v366
      %v368 = vand.u32 %v367, 4294901760
      %v369 = vsub.f32 %v367, %v368
      %v370 = vand.u32 %v369, 4294901760
      %371 = vmatpush.msra.mxu0 %v370
      %v372 = vand.u32 %v224, 4294901760
      %v373 = vsub.f32 %v224, %v372
      %v374 = vand.u32 %v373, 4294901760
      %v375 = vsub.f32 %v373, %v374
      %v376 = vand.u32 %v375, 4294901760
      %377 = vmatpush.msra.mxu0 %v376
      %v378 = vand.u32 %v223, 4294901760
      %v379 = vsub.f32 %v223, %v378
      %v380 = vand.u32 %v379, 4294901760
      %v381 = vsub.f32 %v379, %v380
      %v382 = vand.u32 %v381, 4294901760
      %383 = vmatpush.msra.mxu0 %v382
      %v384 = vand.u32 %v222, 4294901760
      %v385 = vsub.f32 %v222, %v384
      %v386 = vand.u32 %v385, 4294901760
      %v387 = vsub.f32 %v385, %v386
      %v388 = vand.u32 %v387, 4294901760
      %389 = vmatpush.msra.mxu0 %v388
      %v390 = vand.u32 %v221, 4294901760
      %v391 = vsub.f32 %v221, %v390
      %v392 = vand.u32 %v391, 4294901760
      %v393 = vsub.f32 %v391, %v392
      %v394 = vand.u32 %v393, 4294901760
      %395 = vmatpush.msra.mxu0 %v394
      %v396 = vand.u32 %v255, 4294901760
      %397 = vmatmul.f32.gmra.mxu0 %v396
      %v398 = vpop.f32.mrf.mxu0
      %v399 = vadd.f32 %v298, %v398
      %400 = vdwg.mxu0
      %v401 = vand.u32 %v236, 4294901760
      %v402 = vsub.f32 %v236, %v401
      %403 = vmatpush.msra.mxu0 %v402
      %v404 = vand.u32 %v235, 4294901760
      %v405 = vsub.f32 %v235, %v404
      %406 = vmatpush.msra.mxu0 %v405
      %v407 = vand.u32 %v234, 4294901760
      %v408 = vsub.f32 %v234, %v407
      %409 = vmatpush.msra.mxu0 %v408
      %v410 = vand.u32 %v233, 4294901760
      %v411 = vsub.f32 %v233, %v410
      %412 = vmatpush.msra.mxu0 %v411
      %v413 = vand.u32 %v232, 4294901760
      %v414 = vsub.f32 %v232, %v413
      %415 = vmatpush.msra.mxu0 %v414
      %v416 = vand.u32 %v231, 4294901760
      %v417 = vsub.f32 %v231, %v416
      %418 = vmatpush.msra.mxu0 %v417
      %v419 = vand.u32 %v230, 4294901760
      %v420 = vsub.f32 %v230, %v419
      %421 = vmatpush.msra.mxu0 %v420
      %v422 = vand.u32 %v229, 4294901760
      %v423 = vsub.f32 %v229, %v422
      %424 = vmatpush.msra.mxu0 %v423
      %v425 = vand.u32 %v228, 4294901760
      %v426 = vsub.f32 %v228, %v425
      %427 = vmatpush.msra.mxu0 %v426
      %v428 = vand.u32 %v227, 4294901760
      %v429 = vsub.f32 %v227, %v428
      %430 = vmatpush.msra.mxu0 %v429
      %v431 = vand.u32 %v226, 4294901760
      %v432 = vsub.f32 %v226, %v431
      %433 = vmatpush.msra.mxu0 %v432
      %v434 = vand.u32 %v225, 4294901760
      %v435 = vsub.f32 %v225, %v434
      %436 = vmatpush.msra.mxu0 %v435
      %v437 = vand.u32 %v224, 4294901760
      %v438 = vsub.f32 %v224, %v437
      %439 = vmatpush.msra.mxu0 %v438
      %v440 = vand.u32 %v223, 4294901760
      %v441 = vsub.f32 %v223, %v440
      %442 = vmatpush.msra.mxu0 %v441
      %v443 = vand.u32 %v222, 4294901760
      %v444 = vsub.f32 %v222, %v443
      %445 = vmatpush.msra.mxu0 %v444
      %v446 = vand.u32 %v221, 4294901760
      %v447 = vsub.f32 %v221, %v446
      %448 = vmatpush.msra.mxu0 %v447
      %v449 = vand.u32 %v255, 4294901760
      %v450 = vsub.f32 %v255, %v449
      %451 = vmatmul.f32.gmra.mxu0 %v450
      %v452 = vpop.f32.mrf.mxu0
      %v453 = vadd.f32 %v399, %v452
      %454 = vdwg.mxu0
      %v455 = vand.u32 %v236, 4294901760
      %456 = vmatpush.msra.mxu0 %v455
      %v457 = vand.u32 %v235, 4294901760
      %458 = vmatpush.msra.mxu0 %v457
      %v459 = vand.u32 %v234, 4294901760
      %460 = vmatpush.msra.mxu0 %v459
      %v461 = vand.u32 %v233, 4294901760
      %462 = vmatpush.msra.mxu0 %v461
      %v463 = vand.u32 %v232, 4294901760
      %464 = vmatpush.msra.mxu0 %v463
      %v465 = vand.u32 %v231, 4294901760
      %466 = vmatpush.msra.mxu0 %v465
      %v467 = vand.u32 %v230, 4294901760
      %468 = vmatpush.msra.mxu0 %v467
      %v469 = vand.u32 %v229, 4294901760
      %470 = vmatpush.msra.mxu0 %v469
      %v471 = vand.u32 %v228, 4294901760
      %472 = vmatpush.msra.mxu0 %v471
      %v473 = vand.u32 %v227, 4294901760
      %474 = vmatpush.msra.mxu0 %v473
      %v475 = vand.u32 %v226, 4294901760
      %476 = vmatpush.msra.mxu0 %v475
      %v477 = vand.u32 %v225, 4294901760
      %478 = vmatpush.msra.mxu0 %v477
      %v479 = vand.u32 %v224, 4294901760
      %480 = vmatpush.msra.mxu0 %v479
      %v481 = vand.u32 %v223, 4294901760
      %482 = vmatpush.msra.mxu0 %v481
      %v483 = vand.u32 %v222, 4294901760
      %484 = vmatpush.msra.mxu0 %v483
      %v485 = vand.u32 %v221, 4294901760
      %486 = vmatpush.msra.mxu0 %v485
      %v487 = vand.u32 %v255, 4294901760
      %v488 = vsub.f32 %v255, %v487
      %v489 = vand.u32 %v488, 4294901760
      %490 = vmatmul.f32.gmra.mxu0 %v489
      %v491 = vpop.f32.mrf.mxu0
      %v492 = vadd.f32 %v453, %v491
      %493 = vdwg.mxu0
      %v494 = vand.u32 %v236, 4294901760
      %v495 = vsub.f32 %v236, %v494
      %v496 = vand.u32 %v495, 4294901760
      %497 = vmatpush.msra.mxu0 %v496
      %v498 = vand.u32 %v235, 4294901760
      %v499 = vsub.f32 %v235, %v498
      %v500 = vand.u32 %v499, 4294901760
      %501 = vmatpush.msra.mxu0 %v500
      %v502 = vand.u32 %v234, 4294901760
      %v503 = vsub.f32 %v234, %v502
      %v504 = vand.u32 %v503, 4294901760
      %505 = vmatpush.msra.mxu0 %v504
      %v506 = vand.u32 %v233, 4294901760
      %v507 = vsub.f32 %v233, %v506
      %v508 = vand.u32 %v507, 4294901760
      %509 = vmatpush.msra.mxu0 %v508
      %v510 = vand.u32 %v232, 4294901760
      %v511 = vsub.f32 %v232, %v510
      %v512 = vand.u32 %v511, 4294901760
      %513 = vmatpush.msra.mxu0 %v512
      %v514 = vand.u32 %v231, 4294901760
      %v515 = vsub.f32 %v231, %v514
      %v516 = vand.u32 %v515, 4294901760
      %517 = vmatpush.msra.mxu0 %v516
      %v518 = vand.u32 %v230, 4294901760
      %v519 = vsub.f32 %v230, %v518
      %v520 = vand.u32 %v519, 4294901760
      %521 = vmatpush.msra.mxu0 %v520
      %v522 = vand.u32 %v229, 4294901760
      %v523 = vsub.f32 %v229, %v522
      %v524 = vand.u32 %v523, 4294901760
      %525 = vmatpush.msra.mxu0 %v524
      %v526 = vand.u32 %v228, 4294901760
      %v527 = vsub.f32 %v228, %v526
      %v528 = vand.u32 %v527, 4294901760
      %529 = vmatpush.msra.mxu0 %v528
      %v530 = vand.u32 %v227, 4294901760
      %v531 = vsub.f32 %v227, %v530
      %v532 = vand.u32 %v531, 4294901760
      %533 = vmatpush.msra.mxu0 %v532
      %v534 = vand.u32 %v226, 4294901760
      %v535 = vsub.f32 %v226, %v534
      %v536 = vand.u32 %v535, 4294901760
      %537 = vmatpush.msra.mxu0 %v536
      %v538 = vand.u32 %v225, 4294901760
      %v539 = vsub.f32 %v225, %v538
      %v540 = vand.u32 %v539, 4294901760
      %541 = vmatpush.msra.mxu0 %v540
      %v542 = vand.u32 %v224, 4294901760
      %v543 = vsub.f32 %v224, %v542
      %v544 = vand.u32 %v543, 4294901760
      %545 = vmatpush.msra.mxu0 %v544
      %v546 = vand.u32 %v223, 4294901760
      %v547 = vsub.f32 %v223, %v546
      %v548 = vand.u32 %v547, 4294901760
      %549 = vmatpush.msra.mxu0 %v548
      %v550 = vand.u32 %v222, 4294901760
      %v551 = vsub.f32 %v222, %v550
      %v552 = vand.u32 %v551, 4294901760
      %553 = vmatpush.msra.mxu0 %v552
      %v554 = vand.u32 %v221, 4294901760
      %v555 = vsub.f32 %v221, %v554
      %v556 = vand.u32 %v555, 4294901760
      %557 = vmatpush.msra.mxu0 %v556
      %v558 = vand.u32 %v255, 4294901760
      %559 = vmatmul.f32.gmra.mxu0 %v558
      %v560 = vpop.f32.mrf.mxu0
      %v561 = vadd.f32 %v492, %v560
      %562 = vdwg.mxu0
      %v563 = vand.u32 %v236, 4294901760
      %564 = vmatpush.msra.mxu0 %v563
      %v565 = vand.u32 %v235, 4294901760
      %566 = vmatpush.msra.mxu0 %v565
      %v567 = vand.u32 %v234, 4294901760
      %568 = vmatpush.msra.mxu0 %v567
      %v569 = vand.u32 %v233, 4294901760
      %570 = vmatpush.msra.mxu0 %v569
      %v571 = vand.u32 %v232, 4294901760
      %572 = vmatpush.msra.mxu0 %v571
      %v573 = vand.u32 %v231, 4294901760
      %574 = vmatpush.msra.mxu0 %v573
      %v575 = vand.u32 %v230, 4294901760
      %576 = vmatpush.msra.mxu0 %v575
      %v577 = vand.u32 %v229, 4294901760
      %578 = vmatpush.msra.mxu0 %v577
      %v579 = vand.u32 %v228, 4294901760
      %580 = vmatpush.msra.mxu0 %v579
      %v581 = vand.u32 %v227, 4294901760
      %582 = vmatpush.msra.mxu0 %v581
      %v583 = vand.u32 %v226, 4294901760
      %584 = vmatpush.msra.mxu0 %v583
      %v585 = vand.u32 %v225, 4294901760
      %586 = vmatpush.msra.mxu0 %v585
      %v587 = vand.u32 %v224, 4294901760
      %588 = vmatpush.msra.mxu0 %v587
      %v589 = vand.u32 %v223, 4294901760
      %590 = vmatpush.msra.mxu0 %v589
      %v591 = vand.u32 %v222, 4294901760
      %592 = vmatpush.msra.mxu0 %v591
      %v593 = vand.u32 %v221, 4294901760
      %594 = vmatpush.msra.mxu0 %v593
      %v595 = vand.u32 %v255, 4294901760
      %596 = vmatmul.f32.gmra.mxu0 %v595
      %v597 = vpop.f32.mrf.mxu0
      %v598 = vadd.f32 %v561, %v597
      %599 = vdwg.mxu0
      %v600 = vand.u32 %v252, 4294901760
      %601 = vmatpush.msra.mxu0 %v600
      %v602 = vand.u32 %v251, 4294901760
      %603 = vmatpush.msra.mxu0 %v602
      %v604 = vand.u32 %v250, 4294901760
      %605 = vmatpush.msra.mxu0 %v604
      %v606 = vand.u32 %v249, 4294901760
      %607 = vmatpush.msra.mxu0 %v606
      %v608 = vand.u32 %v248, 4294901760
      %609 = vmatpush.msra.mxu0 %v608
      %v610 = vand.u32 %v247, 4294901760
      %611 = vmatpush.msra.mxu0 %v610
      %v612 = vand.u32 %v246, 4294901760
      %613 = vmatpush.msra.mxu0 %v612
      %v614 = vand.u32 %v245, 4294901760
      %615 = vmatpush.msra.mxu0 %v614
      %v616 = vand.u32 %v244, 4294901760
      %617 = vmatpush.msra.mxu0 %v616
      %v618 = vand.u32 %v243, 4294901760
      %619 = vmatpush.msra.mxu0 %v618
      %v620 = vand.u32 %v242, 4294901760
      %621 = vmatpush.msra.mxu0 %v620
      %v622 = vand.u32 %v241, 4294901760
      %623 = vmatpush.msra.mxu0 %v622
      %v624 = vand.u32 %v240, 4294901760
      %625 = vmatpush.msra.mxu0 %v624
      %v626 = vand.u32 %v239, 4294901760
      %627 = vmatpush.msra.mxu0 %v626
      %v628 = vand.u32 %v238, 4294901760
      %629 = vmatpush.msra.mxu0 %v628
      %v630 = vand.u32 %v237, 4294901760
      %631 = vmatpush.msra.mxu0 %v630
      %v632 = vand.u32 %v256, 4294901760
      %v633 = vsub.f32 %v256, %v632
      %v634 = vand.u32 %v633, 4294901760
      %v635 = vsub.f32 %v633, %v634
      %v636 = vand.u32 %v635, 4294901760
      %637 = vmatmul.f32.gmra.mxu0 %v636
      %v638 = vpop.f32.mrf.mxu0
      %v639 = vadd.f32 %v598, %v638
      %640 = vdwg.mxu0
      %v641 = vand.u32 %v252, 4294901760
      %v642 = vsub.f32 %v252, %v641
      %v643 = vand.u32 %v642, 4294901760
      %v644 = vsub.f32 %v642, %v643
      %v645 = vand.u32 %v644, 4294901760
      %646 = vmatpush.msra.mxu0 %v645
      %v647 = vand.u32 %v251, 4294901760
      %v648 = vsub.f32 %v251, %v647
      %v649 = vand.u32 %v648, 4294901760
      %v650 = vsub.f32 %v648, %v649
      %v651 = vand.u32 %v650, 4294901760
      %652 = vmatpush.msra.mxu0 %v651
      %v653 = vand.u32 %v250, 4294901760
      %v654 = vsub.f32 %v250, %v653
      %v655 = vand.u32 %v654, 4294901760
      %v656 = vsub.f32 %v654, %v655
      %v657 = vand.u32 %v656, 4294901760
      %658 = vmatpush.msra.mxu0 %v657
      %v659 = vand.u32 %v249, 4294901760
      %v660 = vsub.f32 %v249, %v659
      %v661 = vand.u32 %v660, 4294901760
      %v662 = vsub.f32 %v660, %v661
      %v663 = vand.u32 %v662, 4294901760
      %664 = vmatpush.msra.mxu0 %v663
      %v665 = vand.u32 %v248, 4294901760
      %v666 = vsub.f32 %v248, %v665
      %v667 = vand.u32 %v666, 4294901760
      %v668 = vsub.f32 %v666, %v667
      %v669 = vand.u32 %v668, 4294901760
      %670 = vmatpush.msra.mxu0 %v669
      %v671 = vand.u32 %v247, 4294901760
      %v672 = vsub.f32 %v247, %v671
      %v673 = vand.u32 %v672, 4294901760
      %v674 = vsub.f32 %v672, %v673
      %v675 = vand.u32 %v674, 4294901760
      %676 = vmatpush.msra.mxu0 %v675
      %v677 = vand.u32 %v246, 4294901760
      %v678 = vsub.f32 %v246, %v677
      %v679 = vand.u32 %v678, 4294901760
      %v680 = vsub.f32 %v678, %v679
      %v681 = vand.u32 %v680, 4294901760
      %682 = vmatpush.msra.mxu0 %v681
      %v683 = vand.u32 %v245, 4294901760
      %v684 = vsub.f32 %v245, %v683
      %v685 = vand.u32 %v684, 4294901760
      %v686 = vsub.f32 %v684, %v685
      %v687 = vand.u32 %v686, 4294901760
      %688 = vmatpush.msra.mxu0 %v687
      %v689 = vand.u32 %v244, 4294901760
      %v690 = vsub.f32 %v244, %v689
      %v691 = vand.u32 %v690, 4294901760
      %v692 = vsub.f32 %v690, %v691
      %v693 = vand.u32 %v692, 4294901760
      %694 = vmatpush.msra.mxu0 %v693
      %v695 = vand.u32 %v243, 4294901760
      %v696 = vsub.f32 %v243, %v695
      %v697 = vand.u32 %v696, 4294901760
      %v698 = vsub.f32 %v696, %v697
      %v699 = vand.u32 %v698, 4294901760
      %700 = vmatpush.msra.mxu0 %v699
      %v701 = vand.u32 %v242, 4294901760
      %v702 = vsub.f32 %v242, %v701
      %v703 = vand.u32 %v702, 4294901760
      %v704 = vsub.f32 %v702, %v703
      %v705 = vand.u32 %v704, 4294901760
      %706 = vmatpush.msra.mxu0 %v705
      %v707 = vand.u32 %v241, 4294901760
      %v708 = vsub.f32 %v241, %v707
      %v709 = vand.u32 %v708, 4294901760
      %v710 = vsub.f32 %v708, %v709
      %v711 = vand.u32 %v710, 4294901760
      %712 = vmatpush.msra.mxu0 %v711
      %v713 = vand.u32 %v240, 4294901760
      %v714 = vsub.f32 %v240, %v713
      %v715 = vand.u32 %v714, 4294901760
      %v716 = vsub.f32 %v714, %v715
      %v717 = vand.u32 %v716, 4294901760
      %718 = vmatpush.msra.mxu0 %v717
      %v719 = vand.u32 %v239, 4294901760
      %v720 = vsub.f32 %v239, %v719
      %v721 = vand.u32 %v720, 4294901760
      %v722 = vsub.f32 %v720, %v721
      %v723 = vand.u32 %v722, 4294901760
      %724 = vmatpush.msra.mxu0 %v723
      %v725 = vand.u32 %v238, 4294901760
      %v726 = vsub.f32 %v238, %v725
      %v727 = vand.u32 %v726, 4294901760
      %v728 = vsub.f32 %v726, %v727
      %v729 = vand.u32 %v728, 4294901760
      %730 = vmatpush.msra.mxu0 %v729
      %v731 = vand.u32 %v237, 4294901760
      %v732 = vsub.f32 %v237, %v731
      %v733 = vand.u32 %v732, 4294901760
      %v734 = vsub.f32 %v732, %v733
      %v735 = vand.u32 %v734, 4294901760
      %736 = vmatpush.msra.mxu0 %v735
      %v737 = vand.u32 %v256, 4294901760
      %738 = vmatmul.f32.gmra.mxu0 %v737
      %v739 = vpop.f32.mrf.mxu0
      %v740 = vadd.f32 %v639, %v739
      %741 = vdwg.mxu0
      %v742 = vand.u32 %v252, 4294901760
      %v743 = vsub.f32 %v252, %v742
      %744 = vmatpush.msra.mxu0 %v743
      %v745 = vand.u32 %v251, 4294901760
      %v746 = vsub.f32 %v251, %v745
      %747 = vmatpush.msra.mxu0 %v746
      %v748 = vand.u32 %v250, 4294901760
      %v749 = vsub.f32 %v250, %v748
      %750 = vmatpush.msra.mxu0 %v749
      %v751 = vand.u32 %v249, 4294901760
      %v752 = vsub.f32 %v249, %v751
      %753 = vmatpush.msra.mxu0 %v752
      %v754 = vand.u32 %v248, 4294901760
      %v755 = vsub.f32 %v248, %v754
      %756 = vmatpush.msra.mxu0 %v755
      %v757 = vand.u32 %v247, 4294901760
      %v758 = vsub.f32 %v247, %v757
      %759 = vmatpush.msra.mxu0 %v758
      %v760 = vand.u32 %v246, 4294901760
      %v761 = vsub.f32 %v246, %v760
      %762 = vmatpush.msra.mxu0 %v761
      %v763 = vand.u32 %v245, 4294901760
      %v764 = vsub.f32 %v245, %v763
      %765 = vmatpush.msra.mxu0 %v764
      %v766 = vand.u32 %v244, 4294901760
      %v767 = vsub.f32 %v244, %v766
      %768 = vmatpush.msra.mxu0 %v767
      %v769 = vand.u32 %v243, 4294901760
      %v770 = vsub.f32 %v243, %v769
      %771 = vmatpush.msra.mxu0 %v770
      %v772 = vand.u32 %v242, 4294901760
      %v773 = vsub.f32 %v242, %v772
      %774 = vmatpush.msra.mxu0 %v773
      %v775 = vand.u32 %v241, 4294901760
      %v776 = vsub.f32 %v241, %v775
      %777 = vmatpush.msra.mxu0 %v776
      %v778 = vand.u32 %v240, 4294901760
      %v779 = vsub.f32 %v240, %v778
      %780 = vmatpush.msra.mxu0 %v779
      %v781 = vand.u32 %v239, 4294901760
      %v782 = vsub.f32 %v239, %v781
      %783 = vmatpush.msra.mxu0 %v782
      %v784 = vand.u32 %v238, 4294901760
      %v785 = vsub.f32 %v238, %v784
      %786 = vmatpush.msra.mxu0 %v785
      %v787 = vand.u32 %v237, 4294901760
      %v788 = vsub.f32 %v237, %v787
      %789 = vmatpush.msra.mxu0 %v788
      %v790 = vand.u32 %v256, 4294901760
      %v791 = vsub.f32 %v256, %v790
      %792 = vmatmul.f32.gmra.mxu0 %v791
      %v793 = vpop.f32.mrf.mxu0
      %v794 = vadd.f32 %v740, %v793
      %795 = vdwg.mxu0
      %v796 = vand.u32 %v252, 4294901760
      %797 = vmatpush.msra.mxu0 %v796
      %v798 = vand.u32 %v251, 4294901760
      %799 = vmatpush.msra.mxu0 %v798
      %v800 = vand.u32 %v250, 4294901760
      %801 = vmatpush.msra.mxu0 %v800
      %v802 = vand.u32 %v249, 4294901760
      %803 = vmatpush.msra.mxu0 %v802
      %v804 = vand.u32 %v248, 4294901760
      %805 = vmatpush.msra.mxu0 %v804
      %v806 = vand.u32 %v247, 4294901760
      %807 = vmatpush.msra.mxu0 %v806
      %v808 = vand.u32 %v246, 4294901760
      %809 = vmatpush.msra.mxu0 %v808
      %v810 = vand.u32 %v245, 4294901760
      %811 = vmatpush.msra.mxu0 %v810
      %v812 = vand.u32 %v244, 4294901760
      %813 = vmatpush.msra.mxu0 %v812
      %v814 = vand.u32 %v243, 4294901760
      %815 = vmatpush.msra.mxu0 %v814
      %v816 = vand.u32 %v242, 4294901760
      %817 = vmatpush.msra.mxu0 %v816
      %v818 = vand.u32 %v241, 4294901760
      %819 = vmatpush.msra.mxu0 %v818
      %v820 = vand.u32 %v240, 4294901760
      %821 = vmatpush.msra.mxu0 %v820
      %v822 = vand.u32 %v239, 4294901760
      %823 = vmatpush.msra.mxu0 %v822
      %v824 = vand.u32 %v238, 4294901760
      %825 = vmatpush.msra.mxu0 %v824
      %v826 = vand.u32 %v237, 4294901760
      %827 = vmatpush.msra.mxu0 %v826
      %v828 = vand.u32 %v256, 4294901760
      %v829 = vsub.f32 %v256, %v828
      %v830 = vand.u32 %v829, 4294901760
      %831 = vmatmul.f32.gmra.mxu0 %v830
      %v832 = vpop.f32.mrf.mxu0
      %v833 = vadd.f32 %v794, %v832
      %834 = vdwg.mxu0
      %v835 = vand.u32 %v252, 4294901760
      %v836 = vsub.f32 %v252, %v835
      %v837 = vand.u32 %v836, 4294901760
      %838 = vmatpush.msra.mxu0 %v837
      %v839 = vand.u32 %v251, 4294901760
      %v840 = vsub.f32 %v251, %v839
      %v841 = vand.u32 %v840, 4294901760
      %842 = vmatpush.msra.mxu0 %v841
      %v843 = vand.u32 %v250, 4294901760
      %v844 = vsub.f32 %v250, %v843
      %v845 = vand.u32 %v844, 4294901760
      %846 = vmatpush.msra.mxu0 %v845
      %v847 = vand.u32 %v249, 4294901760
      %v848 = vsub.f32 %v249, %v847
      %v849 = vand.u32 %v848, 4294901760
      %850 = vmatpush.msra.mxu0 %v849
      %v851 = vand.u32 %v248, 4294901760
      %v852 = vsub.f32 %v248, %v851
      %v853 = vand.u32 %v852, 4294901760
      %854 = vmatpush.msra.mxu0 %v853
      %v855 = vand.u32 %v247, 4294901760
      %v856 = vsub.f32 %v247, %v855
      %v857 = vand.u32 %v856, 4294901760
      %858 = vmatpush.msra.mxu0 %v857
      %v859 = vand.u32 %v246, 4294901760
      %v860 = vsub.f32 %v246, %v859
      %v861 = vand.u32 %v860, 4294901760
      %862 = vmatpush.msra.mxu0 %v861
      %v863 = vand.u32 %v245, 4294901760
      %v864 = vsub.f32 %v245, %v863
      %v865 = vand.u32 %v864, 4294901760
      %866 = vmatpush.msra.mxu0 %v865
      %v867 = vand.u32 %v244, 4294901760
      %v868 = vsub.f32 %v244, %v867
      %v869 = vand.u32 %v868, 4294901760
      %870 = vmatpush.msra.mxu0 %v869
      %v871 = vand.u32 %v243, 4294901760
      %v872 = vsub.f32 %v243, %v871
      %v873 = vand.u32 %v872, 4294901760
      %874 = vmatpush.msra.mxu0 %v873
      %v875 = vand.u32 %v242, 4294901760
      %v876 = vsub.f32 %v242, %v875
      %v877 = vand.u32 %v876, 4294901760
      %878 = vmatpush.msra.mxu0 %v877
      %v879 = vand.u32 %v241, 4294901760
      %v880 = vsub.f32 %v241, %v879
      %v881 = vand.u32 %v880, 4294901760
      %882 = vmatpush.msra.mxu0 %v881
      %v883 = vand.u32 %v240, 4294901760
      %v884 = vsub.f32 %v240, %v883
      %v885 = vand.u32 %v884, 4294901760
      %886 = vmatpush.msra.mxu0 %v885
      %v887 = vand.u32 %v239, 4294901760
      %v888 = vsub.f32 %v239, %v887
      %v889 = vand.u32 %v888, 4294901760
      %890 = vmatpush.msra.mxu0 %v889
      %v891 = vand.u32 %v238, 4294901760
      %v892 = vsub.f32 %v238, %v891
      %v893 = vand.u32 %v892, 4294901760
      %894 = vmatpush.msra.mxu0 %v893
      %v895 = vand.u32 %v237, 4294901760
      %v896 = vsub.f32 %v237, %v895
      %v897 = vand.u32 %v896, 4294901760
      %898 = vmatpush.msra.mxu0 %v897
      %v899 = vand.u32 %v256, 4294901760
      %900 = vmatmul.f32.gmra.mxu0 %v899
      %v901 = vpop.f32.mrf.mxu0
      %v902 = vadd.f32 %v833, %v901
      %903 = vdwg.mxu0
      %v904 = vand.u32 %v252, 4294901760
      %905 = vmatpush.msra.mxu0 %v904
      %v906 = vand.u32 %v251, 4294901760
      %907 = vmatpush.msra.mxu0 %v906
      %v908 = vand.u32 %v250, 4294901760
      %909 = vmatpush.msra.mxu0 %v908
      %v910 = vand.u32 %v249, 4294901760
      %911 = vmatpush.msra.mxu0 %v910
      %v912 = vand.u32 %v248, 4294901760
      %913 = vmatpush.msra.mxu0 %v912
      %v914 = vand.u32 %v247, 4294901760
      %915 = vmatpush.msra.mxu0 %v914
      %v916 = vand.u32 %v246, 4294901760
      %917 = vmatpush.msra.mxu0 %v916
      %v918 = vand.u32 %v245, 4294901760
      %919 = vmatpush.msra.mxu0 %v918
      %v920 = vand.u32 %v244, 4294901760
      %921 = vmatpush.msra.mxu0 %v920
      %v922 = vand.u32 %v243, 4294901760
      %923 = vmatpush.msra.mxu0 %v922
      %v924 = vand.u32 %v242, 4294901760
      %925 = vmatpush.msra.mxu0 %v924
      %v926 = vand.u32 %v241, 4294901760
      %927 = vmatpush.msra.mxu0 %v926
      %v928 = vand.u32 %v240, 4294901760
      %929 = vmatpush.msra.mxu0 %v928
      %v930 = vand.u32 %v239, 4294901760
      %931 = vmatpush.msra.mxu0 %v930
      %v932 = vand.u32 %v238, 4294901760
      %933 = vmatpush.msra.mxu0 %v932
      %v934 = vand.u32 %v237, 4294901760
      %935 = vmatpush.msra.mxu0 %v934
      %v936 = vand.u32 %v256, 4294901760
      %937 = vmatmul.f32.gmra.mxu0 %v936
      %v938 = vpop.f32.mrf.mxu0
      %v939 = vadd.f32 %v902, %v938
      %940 = vdwg.mxu0
      %v941 = vld [vmem:[%s212] sm:$0xf]
      %v942 = vmul.f32 %v939, %v941
      %vm943 = vcmask 68608
      %v944 = vsel %vm943, %v942, 0.0
      %945 = vadd.xlane.f32.xlu0 %v944
      %v946 = vpop.xlane.xlu0 %945
      %v947 = vadd.f32 %v946, %v941
      %v948 = vxor.u32 %v947, 2147483648
      %v949 = vmul.f32 %v948, 1.442695
      %v950 = vpow.pop %v949
      %v951 = vadd.f32 %v950, 1.0
      %v952 = vrcp.pop %v951
      %v953 = vmul.f32 %v951, %v952
      %v954 = vsub.f32 1.0, %v953
      %v955 = vmul.f32 %v952, %v954
      %v956 = vadd.f32 %v952, %v955
      %vm957 = vweird.f32 %v951
      %vm958 = vweird.f32 %v952
      %vm959 = vmor %vm957, %vm958
      %v960 = vsel %vm959, %v952, %v956
      %v961 = vand.u32 2147483647, %v951
      %vm962 = vcmp.eq.f32.partialorder %v961, 8.507059e+37
      %v963 = vand.u32 %v951, 2147483648
      %v964 = vor.u32 1.1754944e-38, %v963
      %v965 = vsel %vm962, %v964, %v960
      %v966 = vmul.f32 1.0, %v965
      %968 = vrot.lane.b32.xlu0 %v966, 119
      %v969 = vpop.permute.xlu0 %968
      %vm971 = vcmask 3072
      %972 = vst.msk [vmem:[%s219] sm:$0xf] %vm971, %v969
      %p973 = scmp.lt.s32.totalorder %s18, 1
      %s974 = scalar_select %p973, %s18, 1
      %p975 = scmp.lt.s32.totalorder %s19, 0
      %s976 = scalar_select %p975, %s19, 0
      %s977 = sadd.s32 %s976, %s974
      %s978 = smul.addr %s977, 4
      %s979 = scalar_lea.vmem %s3, %s978
      // Predicated region
      $region33: #{tpu_custom_call.1} parent=31 // pred_check
        %p980 = pneg %p121
      $region34: #{tpu_custom_call.1} parent=31 // pred_check_branch
        %982 = sbr.rel (%p980) target = $region36
      $region35: #{tpu_custom_call.1} parent=31 // pred_region
        _
      $region36: #{tpu_custom_call.1} parent=31 // pred_fallthru
        _
    $region32: #{tpu_custom_call.1} parent=5 // pred_fallthru
      _
    %p983 = scmp.le.s32.totalorder 2, %s9
    // Predicated region
    $region37: #{tpu_custom_call.1} parent=5 // pred_check
      %p984 = pneg %p983
    $region38: #{tpu_custom_call.1} parent=5 // pred_check_branch
      %986 = sbr.rel (%p984) target = $region40
    $region39: #{tpu_custom_call.1} parent=5 // pred_region
      %s987 = ssub.s32 %s9, 2
      // Predicated region
      $region41: #{tpu_custom_call.1} parent=39 // pred_check
        %p988 = pneg %p127
      $region42: #{tpu_custom_call.1} parent=39 // pred_check_branch
        %990 = sbr.rel (%p988) target = $region44
      $region43: #{tpu_custom_call.1} parent=39 // pred_region
        %p991 = scmp.lt.s32.totalorder %s20, 1
        %s992 = scalar_select %p991, %s20, 1
        %p993 = scmp.lt.s32.totalorder %s21, 0
        %s994 = scalar_select %p993, %s21, 0
        %s995 = sadd.s32 %s994, %s992
        %s996 = smul.addr %s995, 4
        %s997 = scalar_lea.vmem %s3, %s996
      $region44: #{tpu_custom_call.1} parent=39 // pred_fallthru
        _
    $region40: #{tpu_custom_call.1} parent=5 // pred_fallthru
      _
  $region6: #{tpu_custom_call.1} parent=0 // loop_footer
    %s13 = sadd.s32 1, %s9
  $region7: #{tpu_custom_call.1} parent=0 // loop_footer_branch
    %8 = sbr.rel target = $region3
  $region8: #{tpu_custom_call.1} parent=0 // loop_exit
    _

</llo_original>
